<compile_context>
chip_gen: v7x
topology: tpu7x:2x2x1
jax: 0.10.0
libtpu: 0.0.40
codegen_flags: <defaults>
</compile_context>

<pallas_src>
import functools

import jax
import jax.numpy as jnp
from jax.experimental import pallas as pl
from jax.experimental.pallas import tpu as pltpu

_HIDDEN = 128       # hidden width of the module (nn.Linear(*, 128))
_LANE = 128         # TPU lane width
_MAX_TILE_B = 512   # batch tile cap (sized for v7x VMEM; fine on v5e/v6e)


def _round_up(x, m):
    return (x + m - 1) // m * m


def _pad2d(a, rows, cols):
    return jnp.pad(a, ((0, rows - a.shape[0]), (0, cols - a.shape[1])))


def _vae_kernel(x_ref, eps_ref,
                w_enc_ref, b_enc_ref,
                w_head_ref, b_head_ref,
                w_d1_ref, b_d1_ref,
                w_d2_ref, b_d2_ref,
                recon_ref, mulv_ref):
    cdt = w_enc_ref.dtype                 # matmul compute dtype (bf16 or f32)
    lat_pad = eps_ref.shape[-1]           # padded latent width (multiple of 128)

    # Encoder: Linear(input_dim, 128) + ReLU  (MXU in cdt, f32 accumulation).
    h = jnp.dot(x_ref[...], w_enc_ref[...],
                preferred_element_type=jnp.float32) + b_enc_ref[...]
    h = jnp.maximum(h, 0.0)

    # Fused latent heads: one lane-dense matmul producing [mu | log_var].
    mulv = jnp.dot(h.astype(cdt), w_head_ref[...],
                   preferred_element_type=jnp.float32) + b_head_ref[...]
    mu = mulv[:, :lat_pad]                # 128-lane-aligned static slices
    log_var = mulv[:, lat_pad:]

    # Reparameterization: z = mu + eps * exp(0.5 * log_var)  (f32, VPU/EUP).
    # Padded latent lanes stay exactly 0 (mu=0, log_var=0 -> std=1, eps=0).
    z = mu + eps_ref[...] * jnp.exp(0.5 * log_var)

    # Decoder: Linear(latent, 128) + ReLU + Linear(128, input_dim) + Sigmoid.
    h2 = jnp.dot(z.astype(cdt), w_d1_ref[...],
                 preferred_element_type=jnp.float32) + b_d1_ref[...]
    h2 = jnp.maximum(h2, 0.0)
    logits = jnp.dot(h2.astype(cdt), w_d2_ref[...],
                     preferred_element_type=jnp.float32) + b_d2_ref[...]
    # Numerically-stable sigmoid via tanh (EUP transcendental slot).
    recon = 0.5 * (jnp.tanh(0.5 * logits) + 1.0)

    recon_ref[...] = recon.astype(recon_ref.dtype)
    mulv_ref[...] = mulv.astype(mulv_ref.dtype)


@functools.partial(jax.jit, static_argnames=("compute_dtype",))
def vae_forward(x, eps, params, *, compute_dtype=jnp.bfloat16):
    """Fused VAE forward.

    x:   (B, input_dim) float32
    eps: (B, latent_dim) float32  -- noise for the reparameterization trick
    params: dict from init_vae_params (weights stored (in, out), biases (1, out))
    Returns (recon, mu, log_var) in float32.
    """
    B, input_dim = x.shape
    latent_dim = eps.shape[1]
    hidden = _HIDDEN
    cdt = compute_dtype

    in_pad = _round_up(input_dim, _LANE)
    lat_pad = _round_up(latent_dim, _LANE)

    tile_b = min(_MAX_TILE_B, _round_up(B, 8))
    b_pad = _round_up(B, tile_b)
    grid = (b_pad // tile_b,)

    # Lane-dense, zero-padded activations. eps kept f32 (elementwise math).
    x_p = _pad2d(x, b_pad, in_pad).astype(cdt)
    eps_p = _pad2d(eps, b_pad, lat_pad).astype(jnp.float32)

    # Pack / zero-pad weights. Latent heads fused: [mu block | log_var block].
    w_enc = _pad2d(params["w_enc"], in_pad, hidden).astype(cdt)
    b_enc = params["b_enc"].astype(jnp.float32)

    w_head = jnp.zeros((hidden, 2 * lat_pad), jnp.float32)
    w_head = w_head.at[:, :latent_dim].set(params["w_mu"])
    w_head = w_head.at[:, lat_pad:lat_pad + latent_dim].set(params["w_lv"])
    w_head = w_head.astype(cdt)
    b_head = jnp.zeros((1, 2 * lat_pad), jnp.float32)
    b_head = b_head.at[:, :latent_dim].set(params["b_mu"])
    b_head = b_head.at[:, lat_pad:lat_pad + latent_dim].set(params["b_lv"])

    w_d1 = _pad2d(params["w_d1"], lat_pad, hidden).astype(cdt)
    b_d1 = params["b_d1"].astype(jnp.float32)
    w_d2 = _pad2d(params["w_d2"], hidden, in_pad).astype(cdt)
    b_d2 = _pad2d(params["b_d2"], 1, in_pad).astype(jnp.float32)

    def act_spec(cols):
        return pl.BlockSpec((tile_b, cols), lambda i: (i, 0))

    def resident_spec(arr):
        # Constant block index -> DMA'd once, stays VMEM-resident across steps.
        return pl.BlockSpec(arr.shape, lambda i: (0, 0))

    in_specs = [
        act_spec(in_pad),                                   # x tile
        act_spec(lat_pad),                                  # eps tile
        resident_spec(w_enc), resident_spec(b_enc),
        resident_spec(w_head), resident_spec(b_head),
        resident_spec(w_d1), resident_spec(b_d1),
        resident_spec(w_d2), resident_spec(b_d2),
    ]
    out_specs = (act_spec(in_pad), act_spec(2 * lat_pad))
    out_shapes = (
        jax.ShapeDtypeStruct((b_pad, in_pad), jnp.float32),      # recon (padded)
        jax.ShapeDtypeStruct((b_pad, 2 * lat_pad), jnp.float32),  # [mu | log_var]
    )

    itemsize = jnp.dtype(cdt).itemsize
    flops = 2 * b_pad * (in_pad * hidden + hidden * 2 * lat_pad
                         + lat_pad * hidden + hidden * in_pad)
    transcendentals = b_pad * (lat_pad + in_pad)     # exp (reparam) + tanh (sigmoid)
    bytes_accessed = int(
        x_p.size * itemsize + eps_p.size * 4
        + (w_enc.size + w_head.size + w_d1.size + w_d2.size) * itemsize
        + (b_enc.size + b_head.size + b_d1.size + b_d2.size) * 4
        + (b_pad * in_pad + b_pad * 2 * lat_pad) * 4)

    recon_p, mulv_p = pl.pallas_call(
        _vae_kernel,
        out_shape=out_shapes,
        grid=grid,
        in_specs=in_specs,
        out_specs=out_specs,
        compiler_params=pltpu.CompilerParams(
            dimension_semantics=("parallel",)),
        cost_estimate=pl.CostEstimate(
            flops=int(flops),
            transcendentals=int(transcendentals),
            bytes_accessed=bytes_accessed),
    )(x_p, eps_p, w_enc, b_enc, w_head, b_head, w_d1, b_d1, w_d2, b_d2)

    recon = recon_p[:B, :input_dim]
    mu = mulv_p[:B, :latent_dim]
    log_var = mulv_p[:B, lat_pad:lat_pad + latent_dim]
    return recon, mu, log_var


def init_vae_params(key, input_dim, latent_dim, hidden=_HIDDEN):
    """Deterministic synthetic init; shapes mirror the PyTorch module.

    Weights stored as (in_features, out_features): y = x @ W + b.
    """
    ks = jax.random.split(key, 10)

    def lin(kw, kb, fan_in, fan_out):
        bound = 1.0 / jnp.sqrt(jnp.float32(fan_in))
        w = jax.random.uniform(kw, (fan_in, fan_out), jnp.float32, -bound, bound)
        b = jax.random.uniform(kb, (1, fan_out), jnp.float32, -bound, bound)
        return w, b

    w_enc, b_enc = lin(ks[0], ks[1], input_dim, hidden)   # encoder Linear
    w_mu, b_mu = lin(ks[2], ks[3], hidden, latent_dim)    # mu head
    w_lv, b_lv = lin(ks[4], ks[5], hidden, latent_dim)    # log_var head
    w_d1, b_d1 = lin(ks[6], ks[7], latent_dim, hidden)    # decoder Linear 1
    w_d2, b_d2 = lin(ks[8], ks[9], hidden, input_dim)     # decoder Linear 2

    return dict(w_enc=w_enc, b_enc=b_enc,
                w_mu=w_mu, b_mu=b_mu,
                w_lv=w_lv, b_lv=b_lv,
                w_d1=w_d1, b_d1=b_d1,
                w_d2=w_d2, b_d2=b_d2)


def vae_forward_ref(x, eps, params):
    """Pure-JAX reference matching the PyTorch forward semantics."""
    h = jax.nn.relu(x @ params["w_enc"] + params["b_enc"])
    mu = h @ params["w_mu"] + params["b_mu"]
    log_var = h @ params["w_lv"] + params["b_lv"]
    z = mu + eps * jnp.exp(0.5 * log_var)
    h2 = jax.nn.relu(z @ params["w_d1"] + params["b_d1"])
    recon = jax.nn.sigmoid(h2 @ params["w_d2"] + params["b_d2"])
    return recon, mu, log_var


if __name__ == "__main__":
    B = 8
    INPUT_DIM = 64
    LATENT_DIM = 16

    key = jax.random.PRNGKey(0)
    k_params, k_x, k_eps = jax.random.split(key, 3)

    params = init_vae_params(k_params, INPUT_DIM, LATENT_DIM)
    x = jax.random.uniform(k_x, (B, INPUT_DIM), jnp.float32)
    # epsilon ~ N(0, 1): same role as torch.randn_like(std), drawn outside the
    # kernel for determinism and passed in as an input.
    eps = jax.random.normal(k_eps, (B, LATENT_DIM), jnp.float32)

    r_ref, mu_ref, lv_ref = vae_forward_ref(x, eps, params)

    # f32-matmul path: strict numerical check against the reference.
    recon32, mu32, lv32 = vae_forward(x, eps, params, compute_dtype=jnp.float32)
    jax.block_until_ready((recon32, mu32, lv32))
    assert recon32.shape == (B, INPUT_DIM)
    assert mu32.shape == (B, LATENT_DIM) and lv32.shape == (B, LATENT_DIM)
    assert jnp.allclose(recon32, r_ref, atol=1e-5, rtol=1e-5)
    assert jnp.allclose(mu32, mu_ref, atol=1e-5, rtol=1e-5)
    assert jnp.allclose(lv32, lv_ref, atol=1e-5, rtol=1e-5)

    # Default fast path (bf16 matmul operands, f32 accumulation): relaxed tol.
    recon, mu, log_var = vae_forward(x, eps, params)
    jax.block_until_ready((recon, mu, log_var))
    assert recon.shape == (B, INPUT_DIM)
    assert mu.shape == (B, LATENT_DIM) and log_var.shape == (B, LATENT_DIM)
    assert jnp.allclose(recon, r_ref, atol=3e-2, rtol=3e-2)
    assert jnp.allclose(mu, mu_ref, atol=3e-2, rtol=3e-2)
    assert jnp.allclose(log_var, lv_ref, atol=3e-2, rtol=3e-2)

    print("KERNEL_OK")
</pallas_src>

<mosaic_0001>
module attributes {stable_mosaic.version = 11 : i64} {
  func.func @_vae_kernel(%arg0: i32, %arg1: memref<8x128xf32, #tpu.memory_space<vmem>>, %arg2: memref<8x128xf32, #tpu.memory_space<vmem>>, %arg3: memref<128x128xf32, #tpu.memory_space<vmem>>, %arg4: memref<1x128xf32, #tpu.memory_space<vmem>>, %arg5: memref<128x256xf32, #tpu.memory_space<vmem>>, %arg6: memref<1x256xf32, #tpu.memory_space<vmem>>, %arg7: memref<128x128xf32, #tpu.memory_space<vmem>>, %arg8: memref<1x128xf32, #tpu.memory_space<vmem>>, %arg9: memref<128x128xf32, #tpu.memory_space<vmem>>, %arg10: memref<1x128xf32, #tpu.memory_space<vmem>>, %arg11: memref<8x128xf32, #tpu.memory_space<vmem>>, %arg12: memref<8x256xf32, #tpu.memory_space<vmem>>) attributes {dimension_semantics = [#tpu.dimension_semantics<parallel>], iteration_bounds = array<i64: 1>, scalar_prefetch = 0 : i64, scratch_operands = 0 : i64, tpu.core_type = #tpu.core_type<tc>, window_params = [{transform_indices = @transform_0, window_bounds = array<i64: 8, 128>}, {transform_indices = @transform_1, window_bounds = array<i64: 8, 128>}, {pipeline_mode = #tpu.pipeline_mode<synchronous>, transform_indices = @transform_2, window_bounds = array<i64: 128, 128>}, {pipeline_mode = #tpu.pipeline_mode<synchronous>, transform_indices = @transform_3, window_bounds = array<i64: 1, 128>}, {pipeline_mode = #tpu.pipeline_mode<synchronous>, transform_indices = @transform_4, window_bounds = array<i64: 128, 256>}, {pipeline_mode = #tpu.pipeline_mode<synchronous>, transform_indices = @transform_5, window_bounds = array<i64: 1, 256>}, {pipeline_mode = #tpu.pipeline_mode<synchronous>, transform_indices = @transform_6, window_bounds = array<i64: 128, 128>}, {pipeline_mode = #tpu.pipeline_mode<synchronous>, transform_indices = @transform_7, window_bounds = array<i64: 1, 128>}, {pipeline_mode = #tpu.pipeline_mode<synchronous>, transform_indices = @transform_8, window_bounds = array<i64: 128, 128>}, {pipeline_mode = #tpu.pipeline_mode<synchronous>, transform_indices = @transform_9, window_bounds = array<i64: 1, 128>}, {transform_indices = @transform_10, window_bounds = array<i64: 8, 128>}, {transform_indices = @transform_11, window_bounds = array<i64: 8, 256>}]} {
    %c0 = arith.constant 0 : index
    %c0_0 = arith.constant 0 : index
    %0 = vector.load %arg1[%c0, %c0_0] : memref<8x128xf32, #tpu.memory_space<vmem>>, vector<8x128xf32>
    %c0_1 = arith.constant 0 : index
    %c0_2 = arith.constant 0 : index
    %1 = vector.load %arg3[%c0_1, %c0_2] : memref<128x128xf32, #tpu.memory_space<vmem>>, vector<128x128xf32>
    %cst = arith.constant dense<0.000000e+00> : vector<8x128xf32>
    %2 = tpu.matmul %0, %1, %cst {dimension_numbers = #tpu.dot_dimension_numbers<[1], [0], [0], [1], [0, 0, 1, 1], [], []>} : vector<8x128xf32>, vector<128x128xf32>, vector<8x128xf32> -> vector<8x128xf32>
    %c0_3 = arith.constant 0 : index
    %c0_4 = arith.constant 0 : index
    %3 = vector.load %arg4[%c0_3, %c0_4] : memref<1x128xf32, #tpu.memory_space<vmem>>, vector<1x128xf32>
    %4 = vector.broadcast %3 : vector<1x128xf32> to vector<8x128xf32>
    %5 = arith.addf %2, %4 : vector<8x128xf32>
    %cst_5 = arith.constant 0.000000e+00 : f32
    %6 = vector.broadcast %cst_5 : f32 to vector<8x128xf32>
    %7 = arith.maximumf %5, %6 : vector<8x128xf32>
    %c0_6 = arith.constant 0 : index
    %c0_7 = arith.constant 0 : index
    %8 = vector.load %arg5[%c0_6, %c0_7] : memref<128x256xf32, #tpu.memory_space<vmem>>, vector<128x256xf32>
    %cst_8 = arith.constant dense<0.000000e+00> : vector<8x256xf32>
    %9 = tpu.matmul %7, %8, %cst_8 {dimension_numbers = #tpu.dot_dimension_numbers<[1], [0], [0], [1], [0, 0, 1, 1], [], []>} : vector<8x128xf32>, vector<128x256xf32>, vector<8x256xf32> -> vector<8x256xf32>
    %c0_9 = arith.constant 0 : index
    %c0_10 = arith.constant 0 : index
    %10 = vector.load %arg6[%c0_9, %c0_10] : memref<1x256xf32, #tpu.memory_space<vmem>>, vector<1x256xf32>
    %11 = vector.broadcast %10 : vector<1x256xf32> to vector<8x256xf32>
    %12 = arith.addf %9, %11 : vector<8x256xf32>
    %13 = vector.extract_strided_slice %12 {offsets = [0, 0], sizes = [8, 128], strides = [1, 1]} : vector<8x256xf32> to vector<8x128xf32>
    %14 = vector.extract_strided_slice %12 {offsets = [0, 128], sizes = [8, 128], strides = [1, 1]} : vector<8x256xf32> to vector<8x128xf32>
    %c0_11 = arith.constant 0 : index
    %c0_12 = arith.constant 0 : index
    %15 = vector.load %arg2[%c0_11, %c0_12] : memref<8x128xf32, #tpu.memory_space<vmem>>, vector<8x128xf32>
    %cst_13 = arith.constant 5.000000e-01 : f32
    %16 = vector.broadcast %cst_13 : f32 to vector<8x128xf32>
    %17 = arith.mulf %16, %14 : vector<8x128xf32>
    %18 = math.exp %17 : vector<8x128xf32>
    %19 = arith.mulf %15, %18 : vector<8x128xf32>
    %20 = arith.addf %13, %19 : vector<8x128xf32>
    %c0_14 = arith.constant 0 : index
    %c0_15 = arith.constant 0 : index
    %21 = vector.load %arg7[%c0_14, %c0_15] : memref<128x128xf32, #tpu.memory_space<vmem>>, vector<128x128xf32>
    %cst_16 = arith.constant dense<0.000000e+00> : vector<8x128xf32>
    %22 = tpu.matmul %20, %21, %cst_16 {dimension_numbers = #tpu.dot_dimension_numbers<[1], [0], [0], [1], [0, 0, 1, 1], [], []>} : vector<8x128xf32>, vector<128x128xf32>, vector<8x128xf32> -> vector<8x128xf32>
    %c0_17 = arith.constant 0 : index
    %c0_18 = arith.constant 0 : index
    %23 = vector.load %arg8[%c0_17, %c0_18] : memref<1x128xf32, #tpu.memory_space<vmem>>, vector<1x128xf32>
    %24 = vector.broadcast %23 : vector<1x128xf32> to vector<8x128xf32>
    %25 = arith.addf %22, %24 : vector<8x128xf32>
    %cst_19 = arith.constant 0.000000e+00 : f32
    %26 = vector.broadcast %cst_19 : f32 to vector<8x128xf32>
    %27 = arith.maximumf %25, %26 : vector<8x128xf32>
    %c0_20 = arith.constant 0 : index
    %c0_21 = arith.constant 0 : index
    %28 = vector.load %arg9[%c0_20, %c0_21] : memref<128x128xf32, #tpu.memory_space<vmem>>, vector<128x128xf32>
    %cst_22 = arith.constant dense<0.000000e+00> : vector<8x128xf32>
    %29 = tpu.matmul %27, %28, %cst_22 {dimension_numbers = #tpu.dot_dimension_numbers<[1], [0], [0], [1], [0, 0, 1, 1], [], []>} : vector<8x128xf32>, vector<128x128xf32>, vector<8x128xf32> -> vector<8x128xf32>
    %c0_23 = arith.constant 0 : index
    %c0_24 = arith.constant 0 : index
    %30 = vector.load %arg10[%c0_23, %c0_24] : memref<1x128xf32, #tpu.memory_space<vmem>>, vector<1x128xf32>
    %31 = vector.broadcast %30 : vector<1x128xf32> to vector<8x128xf32>
    %32 = arith.addf %29, %31 : vector<8x128xf32>
    %cst_25 = arith.constant 5.000000e-01 : f32
    %33 = vector.broadcast %cst_25 : f32 to vector<8x128xf32>
    %34 = arith.mulf %33, %32 : vector<8x128xf32>
    %35 = math.tanh %34 : vector<8x128xf32>
    %cst_26 = arith.constant 1.000000e+00 : f32
    %36 = vector.broadcast %cst_26 : f32 to vector<8x128xf32>
    %37 = arith.addf %35, %36 : vector<8x128xf32>
    %cst_27 = arith.constant 5.000000e-01 : f32
    %38 = vector.broadcast %cst_27 : f32 to vector<8x128xf32>
    %39 = arith.mulf %38, %37 : vector<8x128xf32>
    %c0_28 = arith.constant 0 : index
    %c0_29 = arith.constant 0 : index
    %40 = vector.load %arg11[%c0_28, %c0_29] : memref<8x128xf32, #tpu.memory_space<vmem>>, vector<8x128xf32>
    tpu.vector_store %arg11[%c0_28, %c0_29], %39 {strides = array<i32>} : memref<8x128xf32, #tpu.memory_space<vmem>>, vector<8x128xf32>,
    %c0_30 = arith.constant 0 : index
    %c0_31 = arith.constant 0 : index
    %41 = vector.load %arg12[%c0_30, %c0_31] : memref<8x256xf32, #tpu.memory_space<vmem>>, vector<8x256xf32>
    tpu.vector_store %arg12[%c0_30, %c0_31], %12 {strides = array<i32>} : memref<8x256xf32, #tpu.memory_space<vmem>>, vector<8x256xf32>,
    return
  }
  func.func @transform_0(%arg0: i32) -> (i32, i32) {
    %c0_i32 = arith.constant 0 : i32
    %c0_i32_0 = arith.constant 0 : i32
    return %arg0, %c0_i32 : i32, i32
  }
  func.func @transform_1(%arg0: i32) -> (i32, i32) {
    %c0_i32 = arith.constant 0 : i32
    %c0_i32_0 = arith.constant 0 : i32
    return %arg0, %c0_i32 : i32, i32
  }
  func.func @transform_2(%arg0: i32) -> (i32, i32) {
    %c0_i32 = arith.constant 0 : i32
    %c0_i32_0 = arith.constant 0 : i32
    %c0_i32_1 = arith.constant 0 : i32
    return %c0_i32, %c0_i32_0 : i32, i32
  }
  func.func @transform_3(%arg0: i32) -> (i32, i32) {
    %c0_i32 = arith.constant 0 : i32
    %c0_i32_0 = arith.constant 0 : i32
    %c0_i32_1 = arith.constant 0 : i32
    return %c0_i32, %c0_i32_0 : i32, i32
  }
  func.func @transform_4(%arg0: i32) -> (i32, i32) {
    %c0_i32 = arith.constant 0 : i32
    %c0_i32_0 = arith.constant 0 : i32
    %c0_i32_1 = arith.constant 0 : i32
    return %c0_i32, %c0_i32_0 : i32, i32
  }
  func.func @transform_5(%arg0: i32) -> (i32, i32) {
    %c0_i32 = arith.constant 0 : i32
    %c0_i32_0 = arith.constant 0 : i32
    %c0_i32_1 = arith.constant 0 : i32
    return %c0_i32, %c0_i32_0 : i32, i32
  }
  func.func @transform_6(%arg0: i32) -> (i32, i32) {
    %c0_i32 = arith.constant 0 : i32
    %c0_i32_0 = arith.constant 0 : i32
    %c0_i32_1 = arith.constant 0 : i32
    return %c0_i32, %c0_i32_0 : i32, i32
  }
  func.func @transform_7(%arg0: i32) -> (i32, i32) {
    %c0_i32 = arith.constant 0 : i32
    %c0_i32_0 = arith.constant 0 : i32
    %c0_i32_1 = arith.constant 0 : i32
    return %c0_i32, %c0_i32_0 : i32, i32
  }
  func.func @transform_8(%arg0: i32) -> (i32, i32) {
    %c0_i32 = arith.constant 0 : i32
    %c0_i32_0 = arith.constant 0 : i32
    %c0_i32_1 = arith.constant 0 : i32
    return %c0_i32, %c0_i32_0 : i32, i32
  }
  func.func @transform_9(%arg0: i32) -> (i32, i32) {
    %c0_i32 = arith.constant 0 : i32
    %c0_i32_0 = arith.constant 0 : i32
    %c0_i32_1 = arith.constant 0 : i32
    return %c0_i32, %c0_i32_0 : i32, i32
  }
  func.func @transform_10(%arg0: i32) -> (i32, i32) {
    %c0_i32 = arith.constant 0 : i32
    %c0_i32_0 = arith.constant 0 : i32
    return %arg0, %c0_i32 : i32, i32
  }
  func.func @transform_11(%arg0: i32) -> (i32, i32) {
    %c0_i32 = arith.constant 0 : i32
    %c0_i32_0 = arith.constant 0 : i32
    return %arg0, %c0_i32 : i32, i32
  }
}

</mosaic_0001>

<llo_original>
// kernel: vae_forward.1
$region0: #{vae_forward.1}
  #allocation0 [shape = 'u32[]', space=smem, size = 0x4, offset = 0x4, fixed_abs, tag = 'smem constant byte address 0x4 - core index']
  #allocation1 [shape = 'u32[144,128]{1,0:T(1,128)}', space=vmem, size = 0x12000, scoped, tag = 'internal scratch']
  %s0 = inlined_call_operand.vmem [shape: f32[8,128], index: 0, kind: input, shape index: {}]
  %s1 = inlined_call_operand.vmem [shape: f32[8,128], index: 1, kind: input, shape index: {}]
  %s2 = inlined_call_operand.vmem [shape: f32[128,128], index: 2, kind: input, shape index: {}]
  %s3 = inlined_call_operand.vmem [shape: f32[1,128], index: 3, kind: input, shape index: {}]
  %s4 = inlined_call_operand.vmem [shape: f32[128,256], index: 4, kind: input, shape index: {}]
  %s5 = inlined_call_operand.vmem [shape: f32[1,256], index: 5, kind: input, shape index: {}]
  %s6 = inlined_call_operand.vmem [shape: f32[128,128], index: 6, kind: input, shape index: {}]
  %s7 = inlined_call_operand.vmem [shape: f32[1,128], index: 7, kind: input, shape index: {}]
  %s8 = inlined_call_operand.vmem [shape: f32[128,128], index: 8, kind: input, shape index: {}]
  %s9 = inlined_call_operand.vmem [shape: f32[1,128], index: 9, kind: input, shape index: {}]
  %s10 = inlined_call_operand.hbm [shape: f32[8,128], index: 10, kind: output, shape index: {0}]
  %s11 = inlined_call_operand.vmem [shape: f32[8,256], index: 11, kind: output, shape index: {1}]
  %12 = xla_tuple %s10, %s11
  %s13 = sld [smem:[#allocation0]]
  $region58: #{vae_forward.1} parent=0
    _
  %s15 = ssub.s32 1, %s13
  %s16 = scalar_select 0, %s15, %s13
  $region1: #{vae_forward.1} parent=0
    #allocation2 [shape = 'u8[4096]{0}', space=vmem, size = 0x1000, scoped, tag = 'output window, operand 0, single buffered']
    #allocation3 [shape = 's32[1]{0}', space=sflag, size = 0x4, scoped, tag = 'scoped memory for vae_forward.1']
    %17 = vsyncpa [#allocation3], 0
    // Predicated region
    $region2: #{vae_forward.1} parent=1 // pred_check
      _
    $region3: #{vae_forward.1} parent=1 // pred_check_branch
      %19 = sbr.rel (0) target = $region5
    $region4: #{vae_forward.1} parent=1 // pred_region
      _
    $region5: #{vae_forward.1} parent=1 // pred_fallthru
      _
    // Predicated region
    $region6: #{vae_forward.1} parent=1 // pred_check
      _
    $region7: #{vae_forward.1} parent=1 // pred_check_branch
      %21 = sbr.rel (0) target = $region9
    $region8: #{vae_forward.1} parent=1 // pred_region
      _
    $region9: #{vae_forward.1} parent=1 // pred_fallthru
      _
    // Predicated region
    $region10: #{vae_forward.1} parent=1 // pred_check
      _
    $region11: #{vae_forward.1} parent=1 // pred_check_branch
      %23 = sbr.rel (0) target = $region13
    $region12: #{vae_forward.1} parent=1 // pred_region
      _
    $region13: #{vae_forward.1} parent=1 // pred_fallthru
      _
    // Predicated region
    $region14: #{vae_forward.1} parent=1 // pred_check
      _
    $region15: #{vae_forward.1} parent=1 // pred_check_branch
      %25 = sbr.rel (0) target = $region17
    $region16: #{vae_forward.1} parent=1 // pred_region
      _
    $region17: #{vae_forward.1} parent=1 // pred_fallthru
      _
    // Predicated region
    $region18: #{vae_forward.1} parent=1 // pred_check
      _
    $region19: #{vae_forward.1} parent=1 // pred_check_branch
      %27 = sbr.rel (0) target = $region21
    $region20: #{vae_forward.1} parent=1 // pred_region
      _
    $region21: #{vae_forward.1} parent=1 // pred_fallthru
      _
    // Predicated region
    $region22: #{vae_forward.1} parent=1 // pred_check
      _
    $region23: #{vae_forward.1} parent=1 // pred_check_branch
      %29 = sbr.rel (0) target = $region25
    $region24: #{vae_forward.1} parent=1 // pred_region
      _
    $region25: #{vae_forward.1} parent=1 // pred_fallthru
      _
    // Predicated region
    $region26: #{vae_forward.1} parent=1 // pred_check
      _
    $region27: #{vae_forward.1} parent=1 // pred_check_branch
      %31 = sbr.rel (0) target = $region29
    $region28: #{vae_forward.1} parent=1 // pred_region
      _
    $region29: #{vae_forward.1} parent=1 // pred_fallthru
      _
    // Predicated region
    $region30: #{vae_forward.1} parent=1 // pred_check
      _
    $region31: #{vae_forward.1} parent=1 // pred_check_branch
      %33 = sbr.rel (0) target = $region33
    $region32: #{vae_forward.1} parent=1 // pred_region
      _
    $region33: #{vae_forward.1} parent=1 // pred_fallthru
      _
    // Predicated region
    $region34: #{vae_forward.1} parent=1 // pred_check
      _
    $region35: #{vae_forward.1} parent=1 // pred_check_branch
      %35 = sbr.rel (0) target = $region37
    $region36: #{vae_forward.1} parent=1 // pred_region
      _
    $region37: #{vae_forward.1} parent=1 // pred_fallthru
      _
    // Predicated region
    $region38: #{vae_forward.1} parent=1 // pred_check
      _
    $region39: #{vae_forward.1} parent=1 // pred_check_branch
      %37 = sbr.rel (0) target = $region41
    $region40: #{vae_forward.1} parent=1 // pred_region
      _
    $region41: #{vae_forward.1} parent=1 // pred_fallthru
      _
    %v38 = vld [vmem:[%s0] sm:$0xff]
    %v39 = vld [vmem:[%s2] sm:$0xff]
    %v40 = vld [vmem:[%s2 + $0x8] sm:$0xff]
    %v41 = vld [vmem:[%s2 + $0x10] sm:$0xff]
    %v42 = vld [vmem:[%s2 + $0x18] sm:$0xff]
    %v43 = vld [vmem:[%s2 + $0x20] sm:$0xff]
    %v44 = vld [vmem:[%s2 + $0x28] sm:$0xff]
    %v45 = vld [vmem:[%s2 + $0x30] sm:$0xff]
    %v46 = vld [vmem:[%s2 + $0x38] sm:$0xff]
    %v47 = vld [vmem:[%s2 + $0x40] sm:$0xff]
    %v48 = vld [vmem:[%s2 + $0x48] sm:$0xff]
    %v49 = vld [vmem:[%s2 + $0x50] sm:$0xff]
    %v50 = vld [vmem:[%s2 + $0x58] sm:$0xff]
    %v51 = vld [vmem:[%s2 + $0x60] sm:$0xff]
    %v52 = vld [vmem:[%s2 + $0x68] sm:$0xff]
    %v53 = vld [vmem:[%s2 + $0x70] sm:$0xff]
    %v54 = vld [vmem:[%s2 + $0x78] sm:$0xff]
    %v55 = vld [vmem:[%s3] sm:$0x1]
    %v57 = vlaneseq
    %v58 = vshrl.u32 %v57, 7
    %v59 = vsub.s32 0, %v58
    %v60 = vrot.slane %v55, %v59
    %62 = vmatprep.subr.mxu0 0.0
    %63 = vmatpush1.msra.mxu0 %v39
    %64 = vmatprep.subr.mxu0 0.0
    %65 = vmatpush1.msra.mxu0 %v40
    %66 = vmatprep.subr.mxu0 0.0
    %67 = vmatpush1.msra.mxu0 %v41
    %68 = vmatprep.subr.mxu0 0.0
    %69 = vmatpush1.msra.mxu0 %v42
    %70 = vmatprep.subr.mxu0 0.0
    %71 = vmatpush1.msra.mxu0 %v43
    %72 = vmatprep.subr.mxu0 0.0
    %73 = vmatpush1.msra.mxu0 %v44
    %74 = vmatprep.subr.mxu0 0.0
    %75 = vmatpush1.msra.mxu0 %v45
    %76 = vmatprep.subr.mxu0 0.0
    %77 = vmatpush1.msra.mxu0 %v46
    %78 = vmatprep.subr.mxu0 0.0
    %79 = vmatpush1.msra.mxu0 %v47
    %80 = vmatprep.subr.mxu0 0.0
    %81 = vmatpush1.msra.mxu0 %v48
    %82 = vmatprep.subr.mxu0 0.0
    %83 = vmatpush1.msra.mxu0 %v49
    %84 = vmatprep.subr.mxu0 0.0
    %85 = vmatpush1.msra.mxu0 %v50
    %86 = vmatprep.subr.mxu0 0.0
    %87 = vmatpush1.msra.mxu0 %v51
    %88 = vmatprep.subr.mxu0 0.0
    %89 = vmatpush1.msra.mxu0 %v52
    %90 = vmatprep.subr.mxu0 0.0
    %91 = vmatpush1.msra.mxu0 %v53
    %92 = vmatprep.subr.mxu0 0.0
    %93 = vmatpush1.msra.mxu0 %v54
    %94 = vmatprep.subr.mxu0 0.0
    %95 = vmatpush1.msra.mxu0 0.0
    %96 = vmatprep.subr.mxu0 0.0
    %97 = vmatpush1.msra.mxu0 0.0
    %98 = vmatprep.subr.mxu0 0.0
    %99 = vmatpush1.msra.mxu0 0.0
    %100 = vmatprep.subr.mxu0 0.0
    %101 = vmatpush1.msra.mxu0 0.0
    %102 = vmatprep.subr.mxu0 0.0
    %103 = vmatpush1.msra.mxu0 0.0
    %104 = vmatprep.subr.mxu0 0.0
    %105 = vmatpush1.msra.mxu0 0.0
    %106 = vmatprep.subr.mxu0 0.0
    %107 = vmatpush1.msra.mxu0 0.0
    %108 = vmatprep.subr.mxu0 0.0
    %109 = vmatpush1.msra.mxu0 0.0
    %110 = vmatprep.subr.mxu0 0.0
    %111 = vmatpush1.msra.mxu0 0.0
    %112 = vmatprep.subr.mxu0 0.0
    %113 = vmatpush1.msra.mxu0 0.0
    %114 = vmatprep.subr.mxu0 0.0
    %115 = vmatpush1.msra.mxu0 0.0
    %116 = vmatprep.subr.mxu0 0.0
    %117 = vmatpush1.msra.mxu0 0.0
    %118 = vmatprep.subr.mxu0 0.0
    %119 = vmatpush1.msra.mxu0 0.0
    %120 = vmatprep.subr.mxu0 0.0
    %121 = vmatpush1.msra.mxu0 0.0
    %122 = vmatprep.subr.mxu0 0.0
    %123 = vmatpush1.msra.mxu0 0.0
    %124 = vmatprep.subr.mxu0 0.0
    %125 = vmatpush1.msra.mxu0 0.0
    %126 = vmatprep.mubr.f32.mxu0 0.0
    %127 = vmatmul.mubr.f32.gmra.mrb[0].mxu0 %v38
    %v128 = vpop.f32.mrb[0].mxu0
    %v129 = vadd.f32 %v60, %v128
    %v130 = vpop.f32.mrb[0].mxu0
    %131 = vdwg.mxu0
    %v132 = vmax.f32 %v129, 0.0
    %v133 = vld [vmem:[%s4] sm:$0xff]
    %v134 = vld [vmem:[%s4 + $0x8] sm:$0xff]
    %v135 = vld [vmem:[%s4 + $0x10] sm:$0xff]
    %v136 = vld [vmem:[%s4 + $0x18] sm:$0xff]
    %v137 = vld [vmem:[%s4 + $0x20] sm:$0xff]
    %v138 = vld [vmem:[%s4 + $0x28] sm:$0xff]
    %v139 = vld [vmem:[%s4 + $0x30] sm:$0xff]
    %v140 = vld [vmem:[%s4 + $0x38] sm:$0xff]
    %v141 = vld [vmem:[%s4 + $0x40] sm:$0xff]
    %v142 = vld [vmem:[%s4 + $0x48] sm:$0xff]
    %v143 = vld [vmem:[%s4 + $0x50] sm:$0xff]
    %v144 = vld [vmem:[%s4 + $0x58] sm:$0xff]
    %v145 = vld [vmem:[%s4 + $0x60] sm:$0xff]
    %v146 = vld [vmem:[%s4 + $0x68] sm:$0xff]
    %v147 = vld [vmem:[%s4 + $0x70] sm:$0xff]
    %v148 = vld [vmem:[%s4 + $0x78] sm:$0xff]
    %v149 = vld [vmem:[%s4 + $0x80] sm:$0xff]
    %v150 = vld [vmem:[%s4 + $0x88] sm:$0xff]
    %v151 = vld [vmem:[%s4 + $0x90] sm:$0xff]
    %v152 = vld [vmem:[%s4 + $0x98] sm:$0xff]
    %v153 = vld [vmem:[%s4 + $0xa0] sm:$0xff]
    %v154 = vld [vmem:[%s4 + $0xa8] sm:$0xff]
    %v155 = vld [vmem:[%s4 + $0xb0] sm:$0xff]
    %v156 = vld [vmem:[%s4 + $0xb8] sm:$0xff]
    %v157 = vld [vmem:[%s4 + $0xc0] sm:$0xff]
    %v158 = vld [vmem:[%s4 + $0xc8] sm:$0xff]
    %v159 = vld [vmem:[%s4 + $0xd0] sm:$0xff]
    %v160 = vld [vmem:[%s4 + $0xd8] sm:$0xff]
    %v161 = vld [vmem:[%s4 + $0xe0] sm:$0xff]
    %v162 = vld [vmem:[%s4 + $0xe8] sm:$0xff]
    %v163 = vld [vmem:[%s4 + $0xf0] sm:$0xff]
    %v164 = vld [vmem:[%s4 + $0xf8] sm:$0xff]
    %v165 = vld [vmem:[%s5] sm:$0x3]
    %v167 = vlaneseq
    %v168 = vshrl.u32 %v167, 7
    %v169 = vsub.s32 0, %v168
    %v170 = vrot.slane %v165, %v169
    %v171 = vlaneseq
    %v172 = vshrl.u32 %v171, 7
    %v173 = vsub.s32 1, %v172
    %v174 = vrot.slane %v165, %v173
    %177 = vmatprep.subr.mxu0 %v134
    %178 = vmatpush1.msra.mxu0 %v133
    %179 = vmatprep.subr.mxu0 %v136
    %180 = vmatpush1.msra.mxu0 %v135
    %181 = vmatprep.subr.mxu0 %v138
    %182 = vmatpush1.msra.mxu0 %v137
    %183 = vmatprep.subr.mxu0 %v140
    %184 = vmatpush1.msra.mxu0 %v139
    %185 = vmatprep.subr.mxu0 %v142
    %186 = vmatpush1.msra.mxu0 %v141
    %187 = vmatprep.subr.mxu0 %v144
    %188 = vmatpush1.msra.mxu0 %v143
    %189 = vmatprep.subr.mxu0 %v146
    %190 = vmatpush1.msra.mxu0 %v145
    %191 = vmatprep.subr.mxu0 %v148
    %192 = vmatpush1.msra.mxu0 %v147
    %193 = vmatprep.subr.mxu0 %v150
    %194 = vmatpush1.msra.mxu0 %v149
    %195 = vmatprep.subr.mxu0 %v152
    %196 = vmatpush1.msra.mxu0 %v151
    %197 = vmatprep.subr.mxu0 %v154
    %198 = vmatpush1.msra.mxu0 %v153
    %199 = vmatprep.subr.mxu0 %v156
    %200 = vmatpush1.msra.mxu0 %v155
    %201 = vmatprep.subr.mxu0 %v158
    %202 = vmatpush1.msra.mxu0 %v157
    %203 = vmatprep.subr.mxu0 %v160
    %204 = vmatpush1.msra.mxu0 %v159
    %205 = vmatprep.subr.mxu0 %v162
    %206 = vmatpush1.msra.mxu0 %v161
    %207 = vmatprep.subr.mxu0 %v164
    %208 = vmatpush1.msra.mxu0 %v163
    %209 = vmatprep.subr.mxu0 0.0
    %210 = vmatpush1.msra.mxu0 0.0
    %211 = vmatprep.subr.mxu0 0.0
    %212 = vmatpush1.msra.mxu0 0.0
    %213 = vmatprep.subr.mxu0 0.0
    %214 = vmatpush1.msra.mxu0 0.0
    %215 = vmatprep.subr.mxu0 0.0
    %216 = vmatpush1.msra.mxu0 0.0
    %217 = vmatprep.subr.mxu0 0.0
    %218 = vmatpush1.msra.mxu0 0.0
    %219 = vmatprep.subr.mxu0 0.0
    %220 = vmatpush1.msra.mxu0 0.0
    %221 = vmatprep.subr.mxu0 0.0
    %222 = vmatpush1.msra.mxu0 0.0
    %223 = vmatprep.subr.mxu0 0.0
    %224 = vmatpush1.msra.mxu0 0.0
    %225 = vmatprep.subr.mxu0 0.0
    %226 = vmatpush1.msra.mxu0 0.0
    %227 = vmatprep.subr.mxu0 0.0
    %228 = vmatpush1.msra.mxu0 0.0
    %229 = vmatprep.subr.mxu0 0.0
    %230 = vmatpush1.msra.mxu0 0.0
    %231 = vmatprep.subr.mxu0 0.0
    %232 = vmatpush1.msra.mxu0 0.0
    %233 = vmatprep.subr.mxu0 0.0
    %234 = vmatpush1.msra.mxu0 0.0
    %235 = vmatprep.subr.mxu0 0.0
    %236 = vmatpush1.msra.mxu0 0.0
    %237 = vmatprep.subr.mxu0 0.0
    %238 = vmatpush1.msra.mxu0 0.0
    %239 = vmatprep.subr.mxu0 0.0
    %240 = vmatpush1.msra.mxu0 0.0
    %241 = vmatprep.mubr.f32.mxu0 0.0
    %242 = vmatmul.mubr.f32.gmra.mrb[0].mxu0 %v132
    %v243 = vpop.f32.mrb[0].mxu0
    %v244 = vadd.f32 %v170, %v243
    %v245 = vpop.f32.mrb[0].mxu0
    %v246 = vadd.f32 %v174, %v245
    %247 = vdwg.mxu0
    %v248 = vld [vmem:[%s1] sm:$0xff]
    %v249 = vmul.f32 %v246, 0.5
    %v250 = vmul.f32 %v249, 1.442695
    %v251 = vpow.pop %v250
    %v252 = vmul.f32 %v248, %v251
    %v253 = vadd.f32 %v244, %v252
    %v254 = vld [vmem:[%s6] sm:$0xff]
    %v255 = vld [vmem:[%s6 + $0x8] sm:$0xff]
    %v256 = vld [vmem:[%s6 + $0x10] sm:$0xff]
    %v257 = vld [vmem:[%s6 + $0x18] sm:$0xff]
    %v258 = vld [vmem:[%s6 + $0x20] sm:$0xff]
    %v259 = vld [vmem:[%s6 + $0x28] sm:$0xff]
    %v260 = vld [vmem:[%s6 + $0x30] sm:$0xff]
    %v261 = vld [vmem:[%s6 + $0x38] sm:$0xff]
    %v262 = vld [vmem:[%s6 + $0x40] sm:$0xff]
    %v263 = vld [vmem:[%s6 + $0x48] sm:$0xff]
    %v264 = vld [vmem:[%s6 + $0x50] sm:$0xff]
    %v265 = vld [vmem:[%s6 + $0x58] sm:$0xff]
    %v266 = vld [vmem:[%s6 + $0x60] sm:$0xff]
    %v267 = vld [vmem:[%s6 + $0x68] sm:$0xff]
    %v268 = vld [vmem:[%s6 + $0x70] sm:$0xff]
    %v269 = vld [vmem:[%s6 + $0x78] sm:$0xff]
    %v270 = vld [vmem:[%s7] sm:$0x1]
    %v272 = vlaneseq
    %v273 = vshrl.u32 %v272, 7
    %v274 = vsub.s32 0, %v273
    %v275 = vrot.slane %v270, %v274
    %277 = vmatprep.subr.mxu0 0.0
    %278 = vmatpush1.msra.mxu0 %v254
    %279 = vmatprep.subr.mxu0 0.0
    %280 = vmatpush1.msra.mxu0 %v255
    %281 = vmatprep.subr.mxu0 0.0
    %282 = vmatpush1.msra.mxu0 %v256
    %283 = vmatprep.subr.mxu0 0.0
    %284 = vmatpush1.msra.mxu0 %v257
    %285 = vmatprep.subr.mxu0 0.0
    %286 = vmatpush1.msra.mxu0 %v258
    %287 = vmatprep.subr.mxu0 0.0
    %288 = vmatpush1.msra.mxu0 %v259
    %289 = vmatprep.subr.mxu0 0.0
    %290 = vmatpush1.msra.mxu0 %v260
    %291 = vmatprep.subr.mxu0 0.0
    %292 = vmatpush1.msra.mxu0 %v261
    %293 = vmatprep.subr.mxu0 0.0
    %294 = vmatpush1.msra.mxu0 %v262
    %295 = vmatprep.subr.mxu0 0.0
    %296 = vmatpush1.msra.mxu0 %v263
    %297 = vmatprep.subr.mxu0 0.0
    %298 = vmatpush1.msra.mxu0 %v264
    %299 = vmatprep.subr.mxu0 0.0
    %300 = vmatpush1.msra.mxu0 %v265
    %301 = vmatprep.subr.mxu0 0.0
    %302 = vmatpush1.msra.mxu0 %v266
    %303 = vmatprep.subr.mxu0 0.0
    %304 = vmatpush1.msra.mxu0 %v267
    %305 = vmatprep.subr.mxu0 0.0
    %306 = vmatpush1.msra.mxu0 %v268
    %307 = vmatprep.subr.mxu0 0.0
    %308 = vmatpush1.msra.mxu0 %v269
    %309 = vmatprep.subr.mxu0 0.0
    %310 = vmatpush1.msra.mxu0 0.0
    %311 = vmatprep.subr.mxu0 0.0
    %312 = vmatpush1.msra.mxu0 0.0
    %313 = vmatprep.subr.mxu0 0.0
    %314 = vmatpush1.msra.mxu0 0.0
    %315 = vmatprep.subr.mxu0 0.0
    %316 = vmatpush1.msra.mxu0 0.0
    %317 = vmatprep.subr.mxu0 0.0
    %318 = vmatpush1.msra.mxu0 0.0
    %319 = vmatprep.subr.mxu0 0.0
    %320 = vmatpush1.msra.mxu0 0.0
    %321 = vmatprep.subr.mxu0 0.0
    %322 = vmatpush1.msra.mxu0 0.0
    %323 = vmatprep.subr.mxu0 0.0
    %324 = vmatpush1.msra.mxu0 0.0
    %325 = vmatprep.subr.mxu0 0.0
    %326 = vmatpush1.msra.mxu0 0.0
    %327 = vmatprep.subr.mxu0 0.0
    %328 = vmatpush1.msra.mxu0 0.0
    %329 = vmatprep.subr.mxu0 0.0
    %330 = vmatpush1.msra.mxu0 0.0
    %331 = vmatprep.subr.mxu0 0.0
    %332 = vmatpush1.msra.mxu0 0.0
    %333 = vmatprep.subr.mxu0 0.0
    %334 = vmatpush1.msra.mxu0 0.0
    %335 = vmatprep.subr.mxu0 0.0
    %336 = vmatpush1.msra.mxu0 0.0
    %337 = vmatprep.subr.mxu0 0.0
    %338 = vmatpush1.msra.mxu0 0.0
    %339 = vmatprep.subr.mxu0 0.0
    %340 = vmatpush1.msra.mxu0 0.0
    %341 = vmatprep.mubr.f32.mxu0 0.0
    %342 = vmatmul.mubr.f32.gmra.mrb[0].mxu0 %v253
    %v343 = vpop.f32.mrb[0].mxu0
    %v344 = vadd.f32 %v275, %v343
    %v345 = vpop.f32.mrb[0].mxu0
    %346 = vdwg.mxu0
    %v347 = vmax.f32 %v344, 0.0
    %v348 = vld [vmem:[%s8] sm:$0xff]
    %v349 = vld [vmem:[%s8 + $0x8] sm:$0xff]
    %v350 = vld [vmem:[%s8 + $0x10] sm:$0xff]
    %v351 = vld [vmem:[%s8 + $0x18] sm:$0xff]
    %v352 = vld [vmem:[%s8 + $0x20] sm:$0xff]
    %v353 = vld [vmem:[%s8 + $0x28] sm:$0xff]
    %v354 = vld [vmem:[%s8 + $0x30] sm:$0xff]
    %v355 = vld [vmem:[%s8 + $0x38] sm:$0xff]
    %v356 = vld [vmem:[%s8 + $0x40] sm:$0xff]
    %v357 = vld [vmem:[%s8 + $0x48] sm:$0xff]
    %v358 = vld [vmem:[%s8 + $0x50] sm:$0xff]
    %v359 = vld [vmem:[%s8 + $0x58] sm:$0xff]
    %v360 = vld [vmem:[%s8 + $0x60] sm:$0xff]
    %v361 = vld [vmem:[%s8 + $0x68] sm:$0xff]
    %v362 = vld [vmem:[%s8 + $0x70] sm:$0xff]
    %v363 = vld [vmem:[%s8 + $0x78] sm:$0xff]
    %v364 = vld [vmem:[%s9] sm:$0x1]
    %v366 = vlaneseq
    %v367 = vshrl.u32 %v366, 7
    %v368 = vsub.s32 0, %v367
    %v369 = vrot.slane %v364, %v368
    %371 = vmatprep.subr.mxu0 0.0
    %372 = vmatpush1.msra.mxu0 %v348
    %373 = vmatprep.subr.mxu0 0.0
    %374 = vmatpush1.msra.mxu0 %v349
    %375 = vmatprep.subr.mxu0 0.0
    %376 = vmatpush1.msra.mxu0 %v350
    %377 = vmatprep.subr.mxu0 0.0
    %378 = vmatpush1.msra.mxu0 %v351
    %379 = vmatprep.subr.mxu0 0.0
    %380 = vmatpush1.msra.mxu0 %v352
    %381 = vmatprep.subr.mxu0 0.0
    %382 = vmatpush1.msra.mxu0 %v353
    %383 = vmatprep.subr.mxu0 0.0
    %384 = vmatpush1.msra.mxu0 %v354
    %385 = vmatprep.subr.mxu0 0.0
    %386 = vmatpush1.msra.mxu0 %v355
    %387 = vmatprep.subr.mxu0 0.0
    %388 = vmatpush1.msra.mxu0 %v356
    %389 = vmatprep.subr.mxu0 0.0
    %390 = vmatpush1.msra.mxu0 %v357
    %391 = vmatprep.subr.mxu0 0.0
    %392 = vmatpush1.msra.mxu0 %v358
    %393 = vmatprep.subr.mxu0 0.0
    %394 = vmatpush1.msra.mxu0 %v359
    %395 = vmatprep.subr.mxu0 0.0
    %396 = vmatpush1.msra.mxu0 %v360
    %397 = vmatprep.subr.mxu0 0.0
    %398 = vmatpush1.msra.mxu0 %v361
    %399 = vmatprep.subr.mxu0 0.0
    %400 = vmatpush1.msra.mxu0 %v362
    %401 = vmatprep.subr.mxu0 0.0
    %402 = vmatpush1.msra.mxu0 %v363
    %403 = vmatprep.subr.mxu0 0.0
    %404 = vmatpush1.msra.mxu0 0.0
    %405 = vmatprep.subr.mxu0 0.0
    %406 = vmatpush1.msra.mxu0 0.0
    %407 = vmatprep.subr.mxu0 0.0
    %408 = vmatpush1.msra.mxu0 0.0
    %409 = vmatprep.subr.mxu0 0.0
    %410 = vmatpush1.msra.mxu0 0.0
    %411 = vmatprep.subr.mxu0 0.0
    %412 = vmatpush1.msra.mxu0 0.0
    %413 = vmatprep.subr.mxu0 0.0
    %414 = vmatpush1.msra.mxu0 0.0
    %415 = vmatprep.subr.mxu0 0.0
    %416 = vmatpush1.msra.mxu0 0.0
    %417 = vmatprep.subr.mxu0 0.0
    %418 = vmatpush1.msra.mxu0 0.0
    %419 = vmatprep.subr.mxu0 0.0
    %420 = vmatpush1.msra.mxu0 0.0
    %421 = vmatprep.subr.mxu0 0.0
    %422 = vmatpush1.msra.mxu0 0.0
    %423 = vmatprep.subr.mxu0 0.0
    %424 = vmatpush1.msra.mxu0 0.0
    %425 = vmatprep.subr.mxu0 0.0
    %426 = vmatpush1.msra.mxu0 0.0
    %427 = vmatprep.subr.mxu0 0.0
    %428 = vmatpush1.msra.mxu0 0.0
    %429 = vmatprep.subr.mxu0 0.0
    %430 = vmatpush1.msra.mxu0 0.0
    %431 = vmatprep.subr.mxu0 0.0
    %432 = vmatpush1.msra.mxu0 0.0
    %433 = vmatprep.subr.mxu0 0.0
    %434 = vmatpush1.msra.mxu0 0.0
    %435 = vmatprep.mubr.f32.mxu0 0.0
    %436 = vmatmul.mubr.f32.gmra.mrb[0].mxu0 %v347
    %v437 = vpop.f32.mrb[0].mxu0
    %v438 = vadd.f32 %v369, %v437
    %v439 = vpop.f32.mrb[0].mxu0
    %440 = vdwg.mxu0
    %v441 = vmul.f32 %v438, 0.5
    %v442 = vtanh.pop %v441
    %v443 = vadd.f32 %v442, 1.0
    %v444 = vmul.f32 %v443, 0.5
    %445 = vst [vmem:[#allocation2] sm:$0xff] %v444
    %446 = vst [vmem:[%s11] sm:$0xff] %v244
    %447 = vst [vmem:[%s11 + $0x8] sm:$0xff] %v246
    // Predicated region
    $region42: #{vae_forward.1} parent=1 // pred_check
      _
    $region43: #{vae_forward.1} parent=1 // pred_check_branch
      %449 = sbr.rel (0) target = $region45
    $region44: #{vae_forward.1} parent=1 // pred_region
      %s451 = ssub.s32 128, 128
      %452 = vsyncadd [#allocation3], %s451
      %s454 = sshll.u32 [#allocation2], 4
      %s455 = int_to_ptr.vmem [resolvable:$true] %s454
      %457 = dma.vmem_to_hbm [thread:$0]  %s455, 128, %s10, [#allocation3]
    $region45: #{vae_forward.1} parent=1 // pred_fallthru
      _
    // Predicated region
    $region46: #{vae_forward.1} parent=1 // pred_check
      _
    $region47: #{vae_forward.1} parent=1 // pred_check_branch
      %459 = sbr.rel (0) target = $region49
    $region48: #{vae_forward.1} parent=1 // pred_region
      _
    $region49: #{vae_forward.1} parent=1 // pred_fallthru
      _
    // Predicated region
    $region50: #{vae_forward.1} parent=1 // pred_check
      _
    $region51: #{vae_forward.1} parent=1 // pred_check_branch
      %461 = sbr.rel (0) target = $region53
    $region52: #{vae_forward.1} parent=1 // pred_region
      %462 = dma.done [#allocation3], 128
    $region53: #{vae_forward.1} parent=1 // pred_fallthru
      _
    // Predicated region
    $region54: #{vae_forward.1} parent=1 // pred_check
      _
    $region55: #{vae_forward.1} parent=1 // pred_check_branch
      %464 = sbr.rel (0) target = $region57
    $region56: #{vae_forward.1} parent=1 // pred_region
      _
    $region57: #{vae_forward.1} parent=1 // pred_fallthru
      _
    %465 = vsyncpa [#allocation3], 1

</llo_original>
